<compile_context>
chip_gen: v6e
topology: v6e:2x2x1
jax: 0.10.0
libtpu: 0.0.40
codegen_flags: <defaults>
</compile_context>

<pallas_src>
import functools

import jax
import jax.numpy as jnp
from jax.experimental import pallas as pl
from jax.experimental.pallas import tpu as pltpu

_PAD = 8  # keep the augmented sublane dims multiples of the (8, 128) tile


def _logprob_kernel(x_ref,    # (MN+PAD, TB)     transposed one-hot samples + ones row
                    w0_ref,   # (MH+PAD, MN+PAD) config-folded fused layer 1, B0 folded
                    w1_ref,   # (MN, MH+PAD)     block-diagonal layer 2, B1 folded
                    out_ref,  # (M, TB)
                    *, M, N):
    MN = M * N
    x = x_ref[...]                                                   # (MN+P, TB)

    # Layer 1 (all i fused, bias folded): (MH+P, MN+P) @ (MN+P, TB) -> (MH+P, TB)
    h = jnp.dot(w0_ref[...], x, preferred_element_type=jnp.float32)
    h = jnp.maximum(h, 0.0)

    # Layer 2 (block-diagonal over i, bias folded): (MN, MH+P) @ (MH+P, TB) -> (MN, TB)
    logits = jnp.dot(w1_ref[...], h, preferred_element_type=jnp.float32)

    tb = logits.shape[-1]
    logits3 = logits.reshape(M, N, tb)          # leading-dim split: layout no-op
    x3 = x[:MN, :].reshape(M, N, tb)

    # Vectorized per-variable log-softmax (per-segment max for stability) and
    # inner product with the one-hot sample.
    m = jnp.max(logits3, axis=1, keepdims=True)                      # (M, 1, TB)
    lse = m + jnp.log(jnp.sum(jnp.exp(logits3 - m), axis=1, keepdims=True))
    out_ref[...] = jnp.sum((logits3 - lse) * x3, axis=1)             # (M, TB)


@functools.partial(jax.jit, static_argnames=("block_bs",))
def categorical_world_forward(sample, config, W0, B0, W1, B1, block_bs=None):
    """sample: (bs, M, N), config: (M, M); returns logprob (bs, M)."""
    bs, M, N = sample.shape
    H = W0.shape[1]
    MN, MH = M * N, M * H
    MNp, MHp = MN + _PAD, MH + _PAD
    f32 = jnp.float32

    # --- wrapper-side layout prep (fused / folded under jit) ---
    # Transposed ones-augmented samples: x_aug[j*N+k, b] = sample[b, j, k]; row MN = 1.
    x_t = sample.reshape(bs, MN).T.astype(f32)
    x_aug = jnp.zeros((MNp, bs), f32).at[:MN].set(x_t).at[MN].set(1.0)

    # Layer 1: fold config into W0, fuse over i, fold B0 via the ones row, and
    # add a passthrough row so the constant 1 survives relu into layer 2.
    w0c = (W0.astype(f32) * config.astype(f32)[:, None, :, None]).reshape(MH, MN)
    w0_aug = jnp.zeros((MHp, MNp), f32)
    w0_aug = w0_aug.at[:MH, :MN].set(w0c)            # [i*H+h, j*N+k]
    w0_aug = w0_aug.at[:MH, MN].set(B0.reshape(MH).astype(f32))
    w0_aug = w0_aug.at[MH, MN].set(1.0)              # ones passthrough -> h[MH] == 1

    # Layer 2: block-diagonal over i, fold B1 via the passthrough row.
    w1bd = jnp.einsum('ioh,ij->iojh', W1.astype(f32),
                      jnp.eye(M, dtype=f32)).reshape(MN, MH)   # [i*N+o, j*H+h]
    w1_aug = jnp.zeros((MN, MHp), f32)
    w1_aug = w1_aug.at[:, :MH].set(w1bd)
    w1_aug = w1_aug.at[:, MH].set(B1.reshape(MN).astype(f32))

    # --- batch tiling: single step for small bs, parallel steps for large bs ---
    if block_bs is None:
        block_bs = bs if bs <= 128 else 128
    if block_bs != bs and block_bs % 128 != 0:   # lane-tile constraint on blocks
        block_bs = bs
    grid = (pl.cdiv(bs, block_bs),)

    kernel = functools.partial(_logprob_kernel, M=M, N=N)

    out_t = pl.pallas_call(
        kernel,
        out_shape=jax.ShapeDtypeStruct((M, bs), f32),
        grid=grid,
        in_specs=[
            pl.BlockSpec((MNp, block_bs), lambda b: (0, b)),   # samples: tile batch
            pl.BlockSpec((MHp, MNp), lambda b: (0, 0)),        # weights: resident
            pl.BlockSpec((MN, MHp), lambda b: (0, 0)),
        ],
        out_specs=pl.BlockSpec((M, block_bs), lambda b: (0, b)),
        compiler_params=pltpu.CompilerParams(
            dimension_semantics=("parallel",)),
    )(x_aug, w0_aug, w1_aug)

    return out_t.T                                             # (bs, M)


def ref_logprob(sample, config, W0, B0, W1, B1):
    """Pure-JAX reference mirroring the PyTorch code."""
    v = jnp.einsum('ihjk,ij,bjk->bih', W0, config, sample)
    v = v + B0[None]
    v = jax.nn.relu(v)
    v = jnp.einsum('ioh,bih->bio', W1, v)
    v = v + B1[None]
    v = jax.nn.log_softmax(v, axis=2)
    return jnp.einsum('bio,bio->bi', v, sample)


if __name__ == "__main__":
    # Module sizes: M = num_vars, N = num_cats, H = 4 * max(M, N)
    M, N, bs = 8, 8, 16
    H = 4 * max(M, N)

    key = jax.random.PRNGKey(0)
    k_w0, k_b0, k_w1, k_b1, k_s, k_c = jax.random.split(key, 6)

    # Deterministic parameter init (kaiming-normal-like scaling, uniform biases).
    W0 = jax.random.normal(k_w0, (M, H, M, N), jnp.float32) * jnp.sqrt(2.0 / (M * N))
    B0 = jax.random.uniform(k_b0, (M, H), jnp.float32, -0.1, 0.1)
    W1 = jax.random.normal(k_w1, (M, N, H), jnp.float32) * jnp.sqrt(2.0 / H)
    B1 = jax.random.uniform(k_b1, (M, N), jnp.float32, -0.1, 0.1)

    # Inputs: one-hot samples (bs, M, N), binary lower-triangular config (M, M).
    idx = jax.random.randint(k_s, (bs, M), 0, N)
    sample = jax.nn.one_hot(idx, N, dtype=jnp.float32)
    config = jnp.tril(
        jax.random.bernoulli(k_c, 0.5, (M, M)).astype(jnp.float32), -1)

    out = categorical_world_forward(sample, config, W0, B0, W1, B1)
    out = jax.block_until_ready(out)

    ref = ref_logprob(sample, config, W0, B0, W1, B1)
    assert out.shape == (bs, M)
    assert jnp.allclose(out, ref, atol=1e-4, rtol=1e-4), (
        f"max abs err = {jnp.max(jnp.abs(out - ref))}")

    print("KERNEL_OK")
</pallas_src>

<mosaic_0001>
module attributes {stable_mosaic.version = 11 : i64} {
  func.func @_logprob_kernel(%arg0: i32, %arg1: memref<72x16xf32, #tpu.memory_space<vmem>>, %arg2: memref<264x72xf32, #tpu.memory_space<vmem>>, %arg3: memref<64x264xf32, #tpu.memory_space<vmem>>, %arg4: memref<8x16xf32, #tpu.memory_space<vmem>>) attributes {dimension_semantics = [#tpu.dimension_semantics<parallel>], iteration_bounds = array<i64: 1>, scalar_prefetch = 0 : i64, scratch_operands = 0 : i64, tpu.core_type = #tpu.core_type<tc>, window_params = [{transform_indices = @transform_0, window_bounds = array<i64: 72, 16>}, {pipeline_mode = #tpu.pipeline_mode<synchronous>, transform_indices = @transform_1, window_bounds = array<i64: 264, 72>}, {pipeline_mode = #tpu.pipeline_mode<synchronous>, transform_indices = @transform_2, window_bounds = array<i64: 64, 264>}, {transform_indices = @transform_3, window_bounds = array<i64: 8, 16>}]} {
    %c0 = arith.constant 0 : index
    %c0_0 = arith.constant 0 : index
    %0 = vector.load %arg1[%c0, %c0_0] : memref<72x16xf32, #tpu.memory_space<vmem>>, vector<72x16xf32>
    %c0_1 = arith.constant 0 : index
    %c0_2 = arith.constant 0 : index
    %1 = vector.load %arg2[%c0_1, %c0_2] : memref<264x72xf32, #tpu.memory_space<vmem>>, vector<264x72xf32>
    %cst = arith.constant dense<0.000000e+00> : vector<264x16xf32>
    %2 = tpu.matmul %1, %0, %cst {dimension_numbers = #tpu.dot_dimension_numbers<[1], [0], [0], [1], [0, 0, 1, 1], [], []>} : vector<264x72xf32>, vector<72x16xf32>, vector<264x16xf32> -> vector<264x16xf32>
    %cst_3 = arith.constant 0.000000e+00 : f32
    %3 = vector.broadcast %cst_3 : f32 to vector<264x16xf32>
    %4 = arith.maximumf %2, %3 : vector<264x16xf32>
    %c0_4 = arith.constant 0 : index
    %c0_5 = arith.constant 0 : index
    %5 = vector.load %arg3[%c0_4, %c0_5] : memref<64x264xf32, #tpu.memory_space<vmem>>, vector<64x264xf32>
    %cst_6 = arith.constant dense<0.000000e+00> : vector<64x16xf32>
    %6 = tpu.matmul %5, %4, %cst_6 {dimension_numbers = #tpu.dot_dimension_numbers<[1], [0], [0], [1], [0, 0, 1, 1], [], []>} : vector<64x264xf32>, vector<264x16xf32>, vector<64x16xf32> -> vector<64x16xf32>
    %7 = vector.shape_cast %6 : vector<64x16xf32> to vector<8x8x16xf32>
    %8 = vector.extract_strided_slice %0 {offsets = [0, 0], sizes = [64, 16], strides = [1, 1]} : vector<72x16xf32> to vector<64x16xf32>
    %9 = vector.shape_cast %8 : vector<64x16xf32> to vector<8x8x16xf32>
    %cst_7 = arith.constant dense<0xFF800000> : vector<8x16xf32>
    %10 = vector.multi_reduction <maximumf>, %7, %cst_7 [1] : vector<8x8x16xf32> to vector<8x16xf32>
    %11 = vector.shape_cast %10 : vector<8x16xf32> to vector<8x1x16xf32>
    %12 = vector.broadcast %11 : vector<8x1x16xf32> to vector<8x8x16xf32>
    %13 = arith.subf %7, %12 : vector<8x8x16xf32>
    %14 = math.exp %13 : vector<8x8x16xf32>
    %cst_8 = arith.constant dense<0.000000e+00> : vector<8x16xf32>
    %15 = vector.multi_reduction <add>, %14, %cst_8 [1] : vector<8x8x16xf32> to vector<8x16xf32>
    %16 = vector.shape_cast %15 : vector<8x16xf32> to vector<8x1x16xf32>
    %17 = math.log %16 : vector<8x1x16xf32>
    %18 = arith.addf %11, %17 : vector<8x1x16xf32>
    %19 = vector.broadcast %18 : vector<8x1x16xf32> to vector<8x8x16xf32>
    %20 = arith.subf %7, %19 : vector<8x8x16xf32>
    %21 = arith.mulf %20, %9 : vector<8x8x16xf32>
    %cst_9 = arith.constant dense<0.000000e+00> : vector<8x16xf32>
    %22 = vector.multi_reduction <add>, %21, %cst_9 [1] : vector<8x8x16xf32> to vector<8x16xf32>
    %c0_10 = arith.constant 0 : index
    %c0_11 = arith.constant 0 : index
    %23 = vector.load %arg4[%c0_10, %c0_11] : memref<8x16xf32, #tpu.memory_space<vmem>>, vector<8x16xf32>
    tpu.vector_store %arg4[%c0_10, %c0_11], %22 {strides = array<i32>} : memref<8x16xf32, #tpu.memory_space<vmem>>, vector<8x16xf32>,
    return
  }
  func.func @transform_0(%arg0: i32) -> (i32, i32) {
    %c0_i32 = arith.constant 0 : i32
    %c0_i32_0 = arith.constant 0 : i32
    return %c0_i32, %arg0 : i32, i32
  }
  func.func @transform_1(%arg0: i32) -> (i32, i32) {
    %c0_i32 = arith.constant 0 : i32
    %c0_i32_0 = arith.constant 0 : i32
    %c0_i32_1 = arith.constant 0 : i32
    return %c0_i32, %c0_i32_0 : i32, i32
  }
  func.func @transform_2(%arg0: i32) -> (i32, i32) {
    %c0_i32 = arith.constant 0 : i32
    %c0_i32_0 = arith.constant 0 : i32
    %c0_i32_1 = arith.constant 0 : i32
    return %c0_i32, %c0_i32_0 : i32, i32
  }
  func.func @transform_3(%arg0: i32) -> (i32, i32) {
    %c0_i32 = arith.constant 0 : i32
    %c0_i32_0 = arith.constant 0 : i32
    return %c0_i32, %arg0 : i32, i32
  }
}

</mosaic_0001>

<llo_original>
// kernel: categorical_world_forward.1
$region0: #{categorical_world_forward.1}
  #allocation0 [shape = 'u32[]', space=smem, size = 0x4, offset = 0x4, fixed_abs, tag = 'smem constant byte address 0x4 - core index']
  #allocation1 [shape = 'u32[144,128]{1,0:T(1,128)}', space=vmem, size = 0x12000, scoped, tag = 'internal scratch']
  %s0 = inlined_call_operand.vmem [shape: f32[72,16], index: 0, kind: input, shape index: {}]
  %s1 = inlined_call_operand.vmem [shape: f32[264,72], index: 1, kind: input, shape index: {}]
  %s2 = inlined_call_operand.vmem [shape: f32[64,264], index: 2, kind: input, shape index: {}]
  %s3 = inlined_call_operand.hbm [shape: f32[8,16], index: 3, kind: output, shape index: {}]
  %s4 = sld [smem:[#allocation0]]
  $region22: #{categorical_world_forward.1} parent=0
    _
  %s6 = ssub.s32 1, %s4
  %s7 = scalar_select 0, %s6, %s4
  $region1: #{categorical_world_forward.1} parent=0
    #allocation2 [shape = 'u8[4096]{0}', space=vmem, size = 0x1000, scoped, tag = 'output window, operand 0, single buffered']
    #allocation3 [shape = 's32[1]{0}', space=sflag, size = 0x4, scoped, tag = 'scoped memory for categorical_world_forward.1']
    %8 = vsyncpa [#allocation3], 0
    // Predicated region
    $region2: #{categorical_world_forward.1} parent=1 // pred_check
      _
    $region3: #{categorical_world_forward.1} parent=1 // pred_check_branch
      %10 = sbr.rel (0) target = $region5
    $region4: #{categorical_world_forward.1} parent=1 // pred_region
      _
    $region5: #{categorical_world_forward.1} parent=1 // pred_fallthru
      _
    // Predicated region
    $region6: #{categorical_world_forward.1} parent=1 // pred_check
      _
    $region7: #{categorical_world_forward.1} parent=1 // pred_check_branch
      %12 = sbr.rel (0) target = $region9
    $region8: #{categorical_world_forward.1} parent=1 // pred_region
      _
    $region9: #{categorical_world_forward.1} parent=1 // pred_fallthru
      _
    // Predicated region
    $region10: #{categorical_world_forward.1} parent=1 // pred_check
      _
    $region11: #{categorical_world_forward.1} parent=1 // pred_check_branch
      %14 = sbr.rel (0) target = $region13
    $region12: #{categorical_world_forward.1} parent=1 // pred_region
      _
    $region13: #{categorical_world_forward.1} parent=1 // pred_fallthru
      _
    %v15 = vld [vmem:[%s0] sm:$0xff]
    %v16 = vld [vmem:[%s0 + $0x8] sm:$0xff]
    %v17 = vld [vmem:[%s0 + $0x10] sm:$0xff]
    %v18 = vld [vmem:[%s0 + $0x18] sm:$0xff]
    %v19 = vld [vmem:[%s0 + $0x20] sm:$0xff]
    %v20 = vld [vmem:[%s0 + $0x28] sm:$0xff]
    %v21 = vld [vmem:[%s0 + $0x30] sm:$0xff]
    %v22 = vld [vmem:[%s0 + $0x38] sm:$0xff]
    %v23 = vld [vmem:[%s0 + $0x40] sm:$0xff]
    %v24 = vld [vmem:[%s1] sm:$0xff]
    %v25 = vld [vmem:[%s1 + $0x8] sm:$0xff]
    %v26 = vld [vmem:[%s1 + $0x10] sm:$0xff]
    %v27 = vld [vmem:[%s1 + $0x18] sm:$0xff]
    %v28 = vld [vmem:[%s1 + $0x20] sm:$0xff]
    %v29 = vld [vmem:[%s1 + $0x28] sm:$0xff]
    %v30 = vld [vmem:[%s1 + $0x30] sm:$0xff]
    %v31 = vld [vmem:[%s1 + $0x38] sm:$0xff]
    %v32 = vld [vmem:[%s1 + $0x40] sm:$0xff]
    %v33 = vld [vmem:[%s1 + $0x48] sm:$0xff]
    %v34 = vld [vmem:[%s1 + $0x50] sm:$0xff]
    %v35 = vld [vmem:[%s1 + $0x58] sm:$0xff]
    %v36 = vld [vmem:[%s1 + $0x60] sm:$0xff]
    %v37 = vld [vmem:[%s1 + $0x68] sm:$0xff]
    %v38 = vld [vmem:[%s1 + $0x70] sm:$0xff]
    %v39 = vld [vmem:[%s1 + $0x78] sm:$0xff]
    %v40 = vld [vmem:[%s1 + $0x80] sm:$0xff]
    %v41 = vld [vmem:[%s1 + $0x88] sm:$0xff]
    %v42 = vld [vmem:[%s1 + $0x90] sm:$0xff]
    %v43 = vld [vmem:[%s1 + $0x98] sm:$0xff]
    %v44 = vld [vmem:[%s1 + $0xa0] sm:$0xff]
    %v45 = vld [vmem:[%s1 + $0xa8] sm:$0xff]
    %v46 = vld [vmem:[%s1 + $0xb0] sm:$0xff]
    %v47 = vld [vmem:[%s1 + $0xb8] sm:$0xff]
    %v48 = vld [vmem:[%s1 + $0xc0] sm:$0xff]
    %v49 = vld [vmem:[%s1 + $0xc8] sm:$0xff]
    %v50 = vld [vmem:[%s1 + $0xd0] sm:$0xff]
    %v51 = vld [vmem:[%s1 + $0xd8] sm:$0xff]
    %v52 = vld [vmem:[%s1 + $0xe0] sm:$0xff]
    %v53 = vld [vmem:[%s1 + $0xe8] sm:$0xff]
    %v54 = vld [vmem:[%s1 + $0xf0] sm:$0xff]
    %v55 = vld [vmem:[%s1 + $0xf8] sm:$0xff]
    %v56 = vld [vmem:[%s1 + $0x100] sm:$0xff]
    %vm57 = vcmask 588800
    %v59 = vsel %vm57, %v24, 0
    %v62 = vsel %vm57, %v25, 0
    %v65 = vsel %vm57, %v26, 0
    %v68 = vsel %vm57, %v27, 0
    %v71 = vsel %vm57, %v28, 0
    %v74 = vsel %vm57, %v29, 0
    %v77 = vsel %vm57, %v30, 0
    %v80 = vsel %vm57, %v31, 0
    %v83 = vsel %vm57, %v32, 0
    %v86 = vsel %vm57, %v33, 0
    %v89 = vsel %vm57, %v34, 0
    %v92 = vsel %vm57, %v35, 0
    %v95 = vsel %vm57, %v36, 0
    %v98 = vsel %vm57, %v37, 0
    %v101 = vsel %vm57, %v38, 0
    %v104 = vsel %vm57, %v39, 0
    %v107 = vsel %vm57, %v40, 0
    %v110 = vsel %vm57, %v41, 0
    %v113 = vsel %vm57, %v42, 0
    %v116 = vsel %vm57, %v43, 0
    %v119 = vsel %vm57, %v44, 0
    %v122 = vsel %vm57, %v45, 0
    %v125 = vsel %vm57, %v46, 0
    %v128 = vsel %vm57, %v47, 0
    %v131 = vsel %vm57, %v48, 0
    %v134 = vsel %vm57, %v49, 0
    %v137 = vsel %vm57, %v50, 0
    %v140 = vsel %vm57, %v51, 0
    %v143 = vsel %vm57, %v52, 0
    %v146 = vsel %vm57, %v53, 0
    %v149 = vsel %vm57, %v54, 0
    %v152 = vsel %vm57, %v55, 0
    %v155 = vsel %vm57, %v56, 0
    %157 = vmatprep.subr.mxu0 0.0
    %158 = vmatpush1.msra.mxu0 0.0
    %159 = vmatprep.subr.mxu0 0.0
    %160 = vmatpush1.msra.mxu0 0.0
    %161 = vmatprep.subr.mxu0 0.0
    %162 = vmatpush1.msra.mxu0 0.0
    %163 = vmatprep.subr.mxu0 0.0
    %164 = vmatpush1.msra.mxu0 0.0
    %165 = vmatprep.subr.mxu0 0.0
    %166 = vmatpush1.msra.mxu0 0.0
    %167 = vmatprep.subr.mxu0 0.0
    %168 = vmatpush1.msra.mxu0 0.0
    %169 = vmatprep.subr.mxu0 0.0
    %170 = vmatpush1.msra.mxu0 0.0
    %171 = vmatprep.subr.mxu0 0.0
    %172 = vmatpush1.msra.mxu0 %v23
    %173 = vmatprep.subr.mxu0 0.0
    %174 = vmatpush1.msra.mxu0 %v22
    %175 = vmatprep.subr.mxu0 0.0
    %176 = vmatpush1.msra.mxu0 %v21
    %177 = vmatprep.subr.mxu0 0.0
    %178 = vmatpush1.msra.mxu0 %v20
    %179 = vmatprep.subr.mxu0 0.0
    %180 = vmatpush1.msra.mxu0 %v19
    %181 = vmatprep.subr.mxu0 0.0
    %182 = vmatpush1.msra.mxu0 %v18
    %183 = vmatprep.subr.mxu0 0.0
    %184 = vmatpush1.msra.mxu0 %v17
    %185 = vmatprep.subr.mxu0 0.0
    %186 = vmatpush1.msra.mxu0 %v16
    %187 = vmatprep.subr.mxu0 0.0
    %188 = vmatpush1.msra.mxu0 %v15
    %189 = vmatprep.subr.mxu0 0.0
    %190 = vmatpush2.msra.mxu0 0.0
    %191 = vmatprep.subr.mxu0 0.0
    %192 = vmatpush2.msra.mxu0 0.0
    %193 = vmatprep.subr.mxu0 0.0
    %194 = vmatpush2.msra.mxu0 0.0
    %195 = vmatprep.subr.mxu0 0.0
    %196 = vmatpush2.msra.mxu0 0.0
    %197 = vmatprep.subr.mxu0 0.0
    %198 = vmatpush2.msra.mxu0 0.0
    %199 = vmatprep.subr.mxu0 0.0
    %200 = vmatpush2.msra.mxu0 0.0
    %201 = vmatprep.subr.mxu0 0.0
    %202 = vmatpush2.msra.mxu0 0.0
    %203 = vmatprep.subr.mxu0 0.0
    %204 = vmatpush2.msra.mxu0 0.0
    %205 = vmatprep.subr.mxu0 0.0
    %206 = vmatpush2.msra.mxu0 0.0
    %207 = vmatprep.subr.mxu0 0.0
    %208 = vmatpush2.msra.mxu0 0.0
    %209 = vmatprep.subr.mxu0 0.0
    %210 = vmatpush2.msra.mxu0 0.0
    %211 = vmatprep.subr.mxu0 0.0
    %212 = vmatpush2.msra.mxu0 0.0
    %213 = vmatprep.subr.mxu0 0.0
    %214 = vmatpush2.msra.mxu0 0.0
    %215 = vmatprep.subr.mxu0 0.0
    %216 = vmatpush2.msra.mxu0 0.0
    %217 = vmatprep.subr.mxu0 0.0
    %218 = vmatpush2.msra.mxu0 0.0
    %219 = vmatprep.subr.mxu0 0.0
    %220 = vmatpush2.msra.mxu0 0.0
    %221 = vmatprep.mubr.f32.mxu0 0.0
    %222 = vmatmul.mubr.f32.gmra.mxu0 %v59
    %v223 = vpop.f32.mrf.mxu0
    %v224 = vadd.f32 0.0, %v223
    %v225 = vpop.f32.mrf.mxu0
    %226 = vmatprep.mubr.f32.mxu0 0.0
    %227 = vmatmul.mubr.f32.gmra.mxu0 %v62
    %v228 = vpop.f32.mrf.mxu0
    %v229 = vadd.f32 0.0, %v228
    %v230 = vpop.f32.mrf.mxu0
    %231 = vmatprep.mubr.f32.mxu0 0.0
    %232 = vmatmul.mubr.f32.gmra.mxu0 %v65
    %v233 = vpop.f32.mrf.mxu0
    %v234 = vadd.f32 0.0, %v233
    %v235 = vpop.f32.mrf.mxu0
    %236 = vmatprep.mubr.f32.mxu0 0.0
    %237 = vmatmul.mubr.f32.gmra.mxu0 %v68
    %v238 = vpop.f32.mrf.mxu0
    %v239 = vadd.f32 0.0, %v238
    %v240 = vpop.f32.mrf.mxu0
    %241 = vmatprep.mubr.f32.mxu0 0.0
    %242 = vmatmul.mubr.f32.gmra.mxu0 %v71
    %v243 = vpop.f32.mrf.mxu0
    %v244 = vadd.f32 0.0, %v243
    %v245 = vpop.f32.mrf.mxu0
    %246 = vmatprep.mubr.f32.mxu0 0.0
    %247 = vmatmul.mubr.f32.gmra.mxu0 %v74
    %v248 = vpop.f32.mrf.mxu0
    %v249 = vadd.f32 0.0, %v248
    %v250 = vpop.f32.mrf.mxu0
    %251 = vmatprep.mubr.f32.mxu0 0.0
    %252 = vmatmul.mubr.f32.gmra.mxu0 %v77
    %v253 = vpop.f32.mrf.mxu0
    %v254 = vadd.f32 0.0, %v253
    %v255 = vpop.f32.mrf.mxu0
    %256 = vmatprep.mubr.f32.mxu0 0.0
    %257 = vmatmul.mubr.f32.gmra.mxu0 %v80
    %v258 = vpop.f32.mrf.mxu0
    %v259 = vadd.f32 0.0, %v258
    %v260 = vpop.f32.mrf.mxu0
    %261 = vmatprep.mubr.f32.mxu0 0.0
    %262 = vmatmul.mubr.f32.gmra.mxu0 %v83
    %v263 = vpop.f32.mrf.mxu0
    %v264 = vadd.f32 0.0, %v263
    %v265 = vpop.f32.mrf.mxu0
    %266 = vmatprep.mubr.f32.mxu0 0.0
    %267 = vmatmul.mubr.f32.gmra.mxu0 %v86
    %v268 = vpop.f32.mrf.mxu0
    %v269 = vadd.f32 0.0, %v268
    %v270 = vpop.f32.mrf.mxu0
    %271 = vmatprep.mubr.f32.mxu0 0.0
    %272 = vmatmul.mubr.f32.gmra.mxu0 %v89
    %v273 = vpop.f32.mrf.mxu0
    %v274 = vadd.f32 0.0, %v273
    %v275 = vpop.f32.mrf.mxu0
    %276 = vmatprep.mubr.f32.mxu0 0.0
    %277 = vmatmul.mubr.f32.gmra.mxu0 %v92
    %v278 = vpop.f32.mrf.mxu0
    %v279 = vadd.f32 0.0, %v278
    %v280 = vpop.f32.mrf.mxu0
    %281 = vmatprep.mubr.f32.mxu0 0.0
    %282 = vmatmul.mubr.f32.gmra.mxu0 %v95
    %v283 = vpop.f32.mrf.mxu0
    %v284 = vadd.f32 0.0, %v283
    %v285 = vpop.f32.mrf.mxu0
    %286 = vmatprep.mubr.f32.mxu0 0.0
    %287 = vmatmul.mubr.f32.gmra.mxu0 %v98
    %v288 = vpop.f32.mrf.mxu0
    %v289 = vadd.f32 0.0, %v288
    %v290 = vpop.f32.mrf.mxu0
    %291 = vmatprep.mubr.f32.mxu0 0.0
    %292 = vmatmul.mubr.f32.gmra.mxu0 %v101
    %v293 = vpop.f32.mrf.mxu0
    %v294 = vadd.f32 0.0, %v293
    %v295 = vpop.f32.mrf.mxu0
    %296 = vmatprep.mubr.f32.mxu0 0.0
    %297 = vmatmul.mubr.f32.gmra.mxu0 %v104
    %v298 = vpop.f32.mrf.mxu0
    %v299 = vadd.f32 0.0, %v298
    %v300 = vpop.f32.mrf.mxu0
    %301 = vmatprep.mubr.f32.mxu0 0.0
    %302 = vmatmul.mubr.f32.gmra.mxu0 %v107
    %v303 = vpop.f32.mrf.mxu0
    %v304 = vadd.f32 0.0, %v303
    %v305 = vpop.f32.mrf.mxu0
    %306 = vmatprep.mubr.f32.mxu0 0.0
    %307 = vmatmul.mubr.f32.gmra.mxu0 %v110
    %v308 = vpop.f32.mrf.mxu0
    %v309 = vadd.f32 0.0, %v308
    %v310 = vpop.f32.mrf.mxu0
    %311 = vmatprep.mubr.f32.mxu0 0.0
    %312 = vmatmul.mubr.f32.gmra.mxu0 %v113
    %v313 = vpop.f32.mrf.mxu0
    %v314 = vadd.f32 0.0, %v313
    %v315 = vpop.f32.mrf.mxu0
    %316 = vmatprep.mubr.f32.mxu0 0.0
    %317 = vmatmul.mubr.f32.gmra.mxu0 %v116
    %v318 = vpop.f32.mrf.mxu0
    %v319 = vadd.f32 0.0, %v318
    %v320 = vpop.f32.mrf.mxu0
    %321 = vmatprep.mubr.f32.mxu0 0.0
    %322 = vmatmul.mubr.f32.gmra.mxu0 %v119
    %v323 = vpop.f32.mrf.mxu0
    %v324 = vadd.f32 0.0, %v323
    %v325 = vpop.f32.mrf.mxu0
    %326 = vmatprep.mubr.f32.mxu0 0.0
    %327 = vmatmul.mubr.f32.gmra.mxu0 %v122
    %v328 = vpop.f32.mrf.mxu0
    %v329 = vadd.f32 0.0, %v328
    %v330 = vpop.f32.mrf.mxu0
    %331 = vmatprep.mubr.f32.mxu0 0.0
    %332 = vmatmul.mubr.f32.gmra.mxu0 %v125
    %v333 = vpop.f32.mrf.mxu0
    %v334 = vadd.f32 0.0, %v333
    %v335 = vpop.f32.mrf.mxu0
    %336 = vmatprep.mubr.f32.mxu0 0.0
    %337 = vmatmul.mubr.f32.gmra.mxu0 %v128
    %v338 = vpop.f32.mrf.mxu0
    %v339 = vadd.f32 0.0, %v338
    %v340 = vpop.f32.mrf.mxu0
    %341 = vmatprep.mubr.f32.mxu0 0.0
    %342 = vmatmul.mubr.f32.gmra.mxu0 %v131
    %v343 = vpop.f32.mrf.mxu0
    %v344 = vadd.f32 0.0, %v343
    %v345 = vpop.f32.mrf.mxu0
    %346 = vmatprep.mubr.f32.mxu0 0.0
    %347 = vmatmul.mubr.f32.gmra.mxu0 %v134
    %v348 = vpop.f32.mrf.mxu0
    %v349 = vadd.f32 0.0, %v348
    %v350 = vpop.f32.mrf.mxu0
    %351 = vmatprep.mubr.f32.mxu0 0.0
    %352 = vmatmul.mubr.f32.gmra.mxu0 %v137
    %v353 = vpop.f32.mrf.mxu0
    %v354 = vadd.f32 0.0, %v353
    %v355 = vpop.f32.mrf.mxu0
    %356 = vmatprep.mubr.f32.mxu0 0.0
    %357 = vmatmul.mubr.f32.gmra.mxu0 %v140
    %v358 = vpop.f32.mrf.mxu0
    %v359 = vadd.f32 0.0, %v358
    %v360 = vpop.f32.mrf.mxu0
    %361 = vmatprep.mubr.f32.mxu0 0.0
    %362 = vmatmul.mubr.f32.gmra.mxu0 %v143
    %v363 = vpop.f32.mrf.mxu0
    %v364 = vadd.f32 0.0, %v363
    %v365 = vpop.f32.mrf.mxu0
    %366 = vmatprep.mubr.f32.mxu0 0.0
    %367 = vmatmul.mubr.f32.gmra.mxu0 %v146
    %v368 = vpop.f32.mrf.mxu0
    %v369 = vadd.f32 0.0, %v368
    %v370 = vpop.f32.mrf.mxu0
    %371 = vmatprep.mubr.f32.mxu0 0.0
    %372 = vmatmul.mubr.f32.gmra.mxu0 %v149
    %v373 = vpop.f32.mrf.mxu0
    %v374 = vadd.f32 0.0, %v373
    %v375 = vpop.f32.mrf.mxu0
    %376 = vmatprep.mubr.f32.mxu0 0.0
    %377 = vmatmul.mubr.f32.gmra.mxu0 %v152
    %v378 = vpop.f32.mrf.mxu0
    %v379 = vadd.f32 0.0, %v378
    %v380 = vpop.f32.mrf.mxu0
    %381 = vmatprep.mubr.f32.mxu0 0.0
    %382 = vmatmul.mubr.f32.gmra.mxu0 %v155
    %v383 = vpop.f32.mrf.mxu0
    %v384 = vadd.f32 0.0, %v383
    %v385 = vpop.f32.mrf.mxu0
    %386 = vdwg.mxu0
    %v387 = vmax.f32 %v224, 0.0
    %v388 = vmax.f32 %v229, 0.0
    %v389 = vmax.f32 %v234, 0.0
    %v390 = vmax.f32 %v239, 0.0
    %v391 = vmax.f32 %v244, 0.0
    %v392 = vmax.f32 %v249, 0.0
    %v393 = vmax.f32 %v254, 0.0
    %v394 = vmax.f32 %v259, 0.0
    %v395 = vmax.f32 %v264, 0.0
    %v396 = vmax.f32 %v269, 0.0
    %v397 = vmax.f32 %v274, 0.0
    %v398 = vmax.f32 %v279, 0.0
    %v399 = vmax.f32 %v284, 0.0
    %v400 = vmax.f32 %v289, 0.0
    %v401 = vmax.f32 %v294, 0.0
    %v402 = vmax.f32 %v299, 0.0
    %v403 = vmax.f32 %v304, 0.0
    %v404 = vmax.f32 %v309, 0.0
    %v405 = vmax.f32 %v314, 0.0
    %v406 = vmax.f32 %v319, 0.0
    %v407 = vmax.f32 %v324, 0.0
    %v408 = vmax.f32 %v329, 0.0
    %v409 = vmax.f32 %v334, 0.0
    %v410 = vmax.f32 %v339, 0.0
    %v411 = vmax.f32 %v344, 0.0
    %v412 = vmax.f32 %v349, 0.0
    %v413 = vmax.f32 %v354, 0.0
    %v414 = vmax.f32 %v359, 0.0
    %v415 = vmax.f32 %v364, 0.0
    %v416 = vmax.f32 %v369, 0.0
    %v417 = vmax.f32 %v374, 0.0
    %v418 = vmax.f32 %v379, 0.0
    %v419 = vmax.f32 %v384, 0.0
    %v420 = vld [vmem:[%s2] sm:$0xff]
    %v421 = vld [vmem:[%s2 + $0x8] sm:$0xff]
    %v422 = vld [vmem:[%s2 + $0x10] sm:$0xff]
    %v423 = vld [vmem:[%s2 + $0x18] sm:$0xff]
    %v424 = vld [vmem:[%s2 + $0x20] sm:$0xff]
    %v425 = vld [vmem:[%s2 + $0x28] sm:$0xff]
    %v426 = vld [vmem:[%s2 + $0x30] sm:$0xff]
    %v427 = vld [vmem:[%s2 + $0x38] sm:$0xff]
    %v428 = vld [vmem:[%s2 + $0x40] sm:$0xff]
    %v429 = vld [vmem:[%s2 + $0x48] sm:$0xff]
    %v430 = vld [vmem:[%s2 + $0x50] sm:$0xff]
    %v431 = vld [vmem:[%s2 + $0x58] sm:$0xff]
    %v432 = vld [vmem:[%s2 + $0x60] sm:$0xff]
    %v433 = vld [vmem:[%s2 + $0x68] sm:$0xff]
    %v434 = vld [vmem:[%s2 + $0x70] sm:$0xff]
    %v435 = vld [vmem:[%s2 + $0x78] sm:$0xff]
    %v436 = vld [vmem:[%s2 + $0x80] sm:$0xff]
    %v437 = vld [vmem:[%s2 + $0x88] sm:$0xff]
    %v438 = vld [vmem:[%s2 + $0x90] sm:$0xff]
    %v439 = vld [vmem:[%s2 + $0x98] sm:$0xff]
    %v440 = vld [vmem:[%s2 + $0xa0] sm:$0xff]
    %v441 = vld [vmem:[%s2 + $0xa8] sm:$0xff]
    %v442 = vld [vmem:[%s2 + $0xb0] sm:$0xff]
    %v443 = vld [vmem:[%s2 + $0xb8] sm:$0xff]
    %vm444 = vcmask 64512
    %v446 = vsel %vm444, %v422, 0
    %v449 = vsel %vm444, %v425, 0
    %v452 = vsel %vm444, %v428, 0
    %v455 = vsel %vm444, %v431, 0
    %v458 = vsel %vm444, %v434, 0
    %v461 = vsel %vm444, %v437, 0
    %v464 = vsel %vm444, %v440, 0
    %v467 = vsel %vm444, %v443, 0
    %469 = vmatprep.subr.mxu0 0.0
    %470 = vmatpush1.msra.mxu0 %v402
    %471 = vmatprep.subr.mxu0 0.0
    %472 = vmatpush1.msra.mxu0 %v401
    %473 = vmatprep.subr.mxu0 0.0
    %474 = vmatpush1.msra.mxu0 %v400
    %475 = vmatprep.subr.mxu0 0.0
    %476 = vmatpush1.msra.mxu0 %v399
    %477 = vmatprep.subr.mxu0 0.0
    %478 = vmatpush1.msra.mxu0 %v398
    %479 = vmatprep.subr.mxu0 0.0
    %480 = vmatpush1.msra.mxu0 %v397
    %481 = vmatprep.subr.mxu0 0.0
    %482 = vmatpush1.msra.mxu0 %v396
    %483 = vmatprep.subr.mxu0 0.0
    %484 = vmatpush1.msra.mxu0 %v395
    %485 = vmatprep.subr.mxu0 0.0
    %486 = vmatpush1.msra.mxu0 %v394
    %487 = vmatprep.subr.mxu0 0.0
    %488 = vmatpush1.msra.mxu0 %v393
    %489 = vmatprep.subr.mxu0 0.0
    %490 = vmatpush1.msra.mxu0 %v392
    %491 = vmatprep.subr.mxu0 0.0
    %492 = vmatpush1.msra.mxu0 %v391
    %493 = vmatprep.subr.mxu0 0.0
    %494 = vmatpush1.msra.mxu0 %v390
    %495 = vmatprep.subr.mxu0 0.0
    %496 = vmatpush1.msra.mxu0 %v389
    %497 = vmatprep.subr.mxu0 0.0
    %498 = vmatpush1.msra.mxu0 %v388
    %499 = vmatprep.subr.mxu0 0.0
    %500 = vmatpush1.msra.mxu0 %v387
    %501 = vmatprep.subr.mxu0 0.0
    %502 = vmatpush2.msra.mxu0 %v418
    %503 = vmatprep.subr.mxu0 0.0
    %504 = vmatpush2.msra.mxu0 %v417
    %505 = vmatprep.subr.mxu0 0.0
    %506 = vmatpush2.msra.mxu0 %v416
    %507 = vmatprep.subr.mxu0 0.0
    %508 = vmatpush2.msra.mxu0 %v415
    %509 = vmatprep.subr.mxu0 0.0
    %510 = vmatpush2.msra.mxu0 %v414
    %511 = vmatprep.subr.mxu0 0.0
    %512 = vmatpush2.msra.mxu0 %v413
    %513 = vmatprep.subr.mxu0 0.0
    %514 = vmatpush2.msra.mxu0 %v412
    %515 = vmatprep.subr.mxu0 0.0
    %516 = vmatpush2.msra.mxu0 %v411
    %517 = vmatprep.subr.mxu0 0.0
    %518 = vmatpush2.msra.mxu0 %v410
    %519 = vmatprep.subr.mxu0 0.0
    %520 = vmatpush2.msra.mxu0 %v409
    %521 = vmatprep.subr.mxu0 0.0
    %522 = vmatpush2.msra.mxu0 %v408
    %523 = vmatprep.subr.mxu0 0.0
    %524 = vmatpush2.msra.mxu0 %v407
    %525 = vmatprep.subr.mxu0 0.0
    %526 = vmatpush2.msra.mxu0 %v406
    %527 = vmatprep.subr.mxu0 0.0
    %528 = vmatpush2.msra.mxu0 %v405
    %529 = vmatprep.subr.mxu0 0.0
    %530 = vmatpush2.msra.mxu0 %v404
    %531 = vmatprep.subr.mxu0 0.0
    %532 = vmatpush2.msra.mxu0 %v403
    %533 = vmatprep.mubr.f32.mxu0 %v421
    %534 = vmatmul.mubr.f32.gmra.mxu0 %v420
    %v535 = vpop.f32.mrf.mxu0
    %v536 = vadd.f32 0.0, %v535
    %v537 = vpop.f32.mrf.mxu0
    %538 = vmatprep.mubr.f32.mxu0 %v424
    %539 = vmatmul.mubr.f32.gmra.mxu0 %v423
    %v540 = vpop.f32.mrf.mxu0
    %v541 = vadd.f32 0.0, %v540
    %v542 = vpop.f32.mrf.mxu0
    %543 = vmatprep.mubr.f32.mxu0 %v427
    %544 = vmatmul.mubr.f32.gmra.mxu0 %v426
    %v545 = vpop.f32.mrf.mxu0
    %v546 = vadd.f32 0.0, %v545
    %v547 = vpop.f32.mrf.mxu0
    %548 = vmatprep.mubr.f32.mxu0 %v430
    %549 = vmatmul.mubr.f32.gmra.mxu0 %v429
    %v550 = vpop.f32.mrf.mxu0
    %v551 = vadd.f32 0.0, %v550
    %v552 = vpop.f32.mrf.mxu0
    %553 = vmatprep.mubr.f32.mxu0 %v433
    %554 = vmatmul.mubr.f32.gmra.mxu0 %v432
    %v555 = vpop.f32.mrf.mxu0
    %v556 = vadd.f32 0.0, %v555
    %v557 = vpop.f32.mrf.mxu0
    %558 = vmatprep.mubr.f32.mxu0 %v436
    %559 = vmatmul.mubr.f32.gmra.mxu0 %v435
    %v560 = vpop.f32.mrf.mxu0
    %v561 = vadd.f32 0.0, %v560
    %v562 = vpop.f32.mrf.mxu0
    %563 = vmatprep.mubr.f32.mxu0 %v439
    %564 = vmatmul.mubr.f32.gmra.mxu0 %v438
    %v565 = vpop.f32.mrf.mxu0
    %v566 = vadd.f32 0.0, %v565
    %v567 = vpop.f32.mrf.mxu0
    %568 = vmatprep.mubr.f32.mxu0 %v442
    %569 = vmatmul.mubr.f32.gmra.mxu0 %v441
    %v570 = vpop.f32.mrf.mxu0
    %v571 = vadd.f32 0.0, %v570
    %v572 = vpop.f32.mrf.mxu0
    %573 = vdwg.mxu0
    %574 = vmatprep.subr.mxu0 0.0
    %575 = vmatpush1.msra.mxu0 0.0
    %576 = vmatprep.subr.mxu0 0.0
    %577 = vmatpush1.msra.mxu0 0.0
    %578 = vmatprep.subr.mxu0 0.0
    %579 = vmatpush1.msra.mxu0 0.0
    %580 = vmatprep.subr.mxu0 0.0
    %581 = vmatpush1.msra.mxu0 0.0
    %582 = vmatprep.subr.mxu0 0.0
    %583 = vmatpush1.msra.mxu0 0.0
    %584 = vmatprep.subr.mxu0 0.0
    %585 = vmatpush1.msra.mxu0 0.0
    %586 = vmatprep.subr.mxu0 0.0
    %587 = vmatpush1.msra.mxu0 0.0
    %588 = vmatprep.subr.mxu0 0.0
    %589 = vmatpush1.msra.mxu0 0.0
    %590 = vmatprep.subr.mxu0 0.0
    %591 = vmatpush1.msra.mxu0 0.0
    %592 = vmatprep.subr.mxu0 0.0
    %593 = vmatpush1.msra.mxu0 0.0
    %594 = vmatprep.subr.mxu0 0.0
    %595 = vmatpush1.msra.mxu0 0.0
    %596 = vmatprep.subr.mxu0 0.0
    %597 = vmatpush1.msra.mxu0 0.0
    %598 = vmatprep.subr.mxu0 0.0
    %599 = vmatpush1.msra.mxu0 0.0
    %600 = vmatprep.subr.mxu0 0.0
    %601 = vmatpush1.msra.mxu0 0.0
    %602 = vmatprep.subr.mxu0 0.0
    %603 = vmatpush1.msra.mxu0 0.0
    %604 = vmatprep.subr.mxu0 0.0
    %605 = vmatpush1.msra.mxu0 %v419
    %606 = vmatprep.subr.mxu0 0.0
    %607 = vmatpush2.msra.mxu0 0.0
    %608 = vmatprep.subr.mxu0 0.0
    %609 = vmatpush2.msra.mxu0 0.0
    %610 = vmatprep.subr.mxu0 0.0
    %611 = vmatpush2.msra.mxu0 0.0
    %612 = vmatprep.subr.mxu0 0.0
    %613 = vmatpush2.msra.mxu0 0.0
    %614 = vmatprep.subr.mxu0 0.0
    %615 = vmatpush2.msra.mxu0 0.0
    %616 = vmatprep.subr.mxu0 0.0
    %617 = vmatpush2.msra.mxu0 0.0
    %618 = vmatprep.subr.mxu0 0.0
    %619 = vmatpush2.msra.mxu0 0.0
    %620 = vmatprep.subr.mxu0 0.0
    %621 = vmatpush2.msra.mxu0 0.0
    %622 = vmatprep.subr.mxu0 0.0
    %623 = vmatpush2.msra.mxu0 0.0
    %624 = vmatprep.subr.mxu0 0.0
    %625 = vmatpush2.msra.mxu0 0.0
    %626 = vmatprep.subr.mxu0 0.0
    %627 = vmatpush2.msra.mxu0 0.0
    %628 = vmatprep.subr.mxu0 0.0
    %629 = vmatpush2.msra.mxu0 0.0
    %630 = vmatprep.subr.mxu0 0.0
    %631 = vmatpush2.msra.mxu0 0.0
    %632 = vmatprep.subr.mxu0 0.0
    %633 = vmatpush2.msra.mxu0 0.0
    %634 = vmatprep.subr.mxu0 0.0
    %635 = vmatpush2.msra.mxu0 0.0
    %636 = vmatprep.subr.mxu0 0.0
    %637 = vmatpush2.msra.mxu0 0.0
    %638 = vmatprep.mubr.f32.mxu0 0.0
    %639 = vmatmul.mubr.f32.gmra.mxu0 %v446
    %v640 = vpop.f32.mrf.mxu0
    %v641 = vadd.f32 %v536, %v640
    %v642 = vpop.f32.mrf.mxu0
    %643 = vmatprep.mubr.f32.mxu0 0.0
    %644 = vmatmul.mubr.f32.gmra.mxu0 %v449
    %v645 = vpop.f32.mrf.mxu0
    %v646 = vadd.f32 %v541, %v645
    %v647 = vpop.f32.mrf.mxu0
    %648 = vmatprep.mubr.f32.mxu0 0.0
    %649 = vmatmul.mubr.f32.gmra.mxu0 %v452
    %v650 = vpop.f32.mrf.mxu0
    %v651 = vadd.f32 %v546, %v650
    %v652 = vpop.f32.mrf.mxu0
    %653 = vmatprep.mubr.f32.mxu0 0.0
    %654 = vmatmul.mubr.f32.gmra.mxu0 %v455
    %v655 = vpop.f32.mrf.mxu0
    %v656 = vadd.f32 %v551, %v655
    %v657 = vpop.f32.mrf.mxu0
    %658 = vmatprep.mubr.f32.mxu0 0.0
    %659 = vmatmul.mubr.f32.gmra.mxu0 %v458
    %v660 = vpop.f32.mrf.mxu0
    %v661 = vadd.f32 %v556, %v660
    %v662 = vpop.f32.mrf.mxu0
    %663 = vmatprep.mubr.f32.mxu0 0.0
    %664 = vmatmul.mubr.f32.gmra.mxu0 %v461
    %v665 = vpop.f32.mrf.mxu0
    %v666 = vadd.f32 %v561, %v665
    %v667 = vpop.f32.mrf.mxu0
    %668 = vmatprep.mubr.f32.mxu0 0.0
    %669 = vmatmul.mubr.f32.gmra.mxu0 %v464
    %v670 = vpop.f32.mrf.mxu0
    %v671 = vadd.f32 %v566, %v670
    %v672 = vpop.f32.mrf.mxu0
    %673 = vmatprep.mubr.f32.mxu0 0.0
    %674 = vmatmul.mubr.f32.gmra.mxu0 %v467
    %v675 = vpop.f32.mrf.mxu0
    %v676 = vadd.f32 %v571, %v675
    %v677 = vpop.f32.mrf.mxu0
    %678 = vdwg.mxu0
    %vm679 = vcmask 130048
    %v680 = vsel %vm679, %v641, -inf
    %v681 = vrot.slane %v680, 4
    %v682 = vmax.f32 %v680, %v681
    %v683 = vrot.slane %v682, 2
    %v684 = vmax.f32 %v682, %v683
    %v685 = vrot.slane %v684, 1
    %v686 = vmax.f32 %v684, %v685
    %v687 = vsel %vm679, %v646, -inf
    %v688 = vrot.slane %v687, 4
    %v689 = vmax.f32 %v687, %v688
    %v690 = vrot.slane %v689, 2
    %v691 = vmax.f32 %v689, %v690
    %v692 = vrot.slane %v691, 1
    %v693 = vmax.f32 %v691, %v692
    %v694 = vsel %vm679, %v651, -inf
    %v695 = vrot.slane %v694, 4
    %v696 = vmax.f32 %v694, %v695
    %v697 = vrot.slane %v696, 2
    %v698 = vmax.f32 %v696, %v697
    %v699 = vrot.slane %v698, 1
    %v700 = vmax.f32 %v698, %v699
    %v701 = vsel %vm679, %v656, -inf
    %v702 = vrot.slane %v701, 4
    %v703 = vmax.f32 %v701, %v702
    %v704 = vrot.slane %v703, 2
    %v705 = vmax.f32 %v703, %v704
    %v706 = vrot.slane %v705, 1
    %v707 = vmax.f32 %v705, %v706
    %v708 = vsel %vm679, %v661, -inf
    %v709 = vrot.slane %v708, 4
    %v710 = vmax.f32 %v708, %v709
    %v711 = vrot.slane %v710, 2
    %v712 = vmax.f32 %v710, %v711
    %v713 = vrot.slane %v712, 1
    %v714 = vmax.f32 %v712, %v713
    %v715 = vsel %vm679, %v666, -inf
    %v716 = vrot.slane %v715, 4
    %v717 = vmax.f32 %v715, %v716
    %v718 = vrot.slane %v717, 2
    %v719 = vmax.f32 %v717, %v718
    %v720 = vrot.slane %v719, 1
    %v721 = vmax.f32 %v719, %v720
    %v722 = vsel %vm679, %v671, -inf
    %v723 = vrot.slane %v722, 4
    %v724 = vmax.f32 %v722, %v723
    %v725 = vrot.slane %v724, 2
    %v726 = vmax.f32 %v724, %v725
    %v727 = vrot.slane %v726, 1
    %v728 = vmax.f32 %v726, %v727
    %v729 = vsel %vm679, %v676, -inf
    %v730 = vrot.slane %v729, 4
    %v731 = vmax.f32 %v729, %v730
    %v732 = vrot.slane %v731, 2
    %v733 = vmax.f32 %v731, %v732
    %v734 = vrot.slane %v733, 1
    %v735 = vmax.f32 %v733, %v734
    %v736 = vsub.f32 %v641, %v686
    %v737 = vsub.f32 %v646, %v693
    %v738 = vsub.f32 %v651, %v700
    %v739 = vsub.f32 %v656, %v707
    %v740 = vsub.f32 %v661, %v714
    %v741 = vsub.f32 %v666, %v721
    %v742 = vsub.f32 %v671, %v728
    %v743 = vsub.f32 %v676, %v735
    %v744 = vmul.f32 %v736, 1.442695
    %v745 = vpow.pop %v744
    %v746 = vmul.f32 %v737, 1.442695
    %v747 = vpow.pop %v746
    %v748 = vmul.f32 %v738, 1.442695
    %v749 = vpow.pop %v748
    %v750 = vmul.f32 %v739, 1.442695
    %v751 = vpow.pop %v750
    %v752 = vmul.f32 %v740, 1.442695
    %v753 = vpow.pop %v752
    %v754 = vmul.f32 %v741, 1.442695
    %v755 = vpow.pop %v754
    %v756 = vmul.f32 %v742, 1.442695
    %v757 = vpow.pop %v756
    %v758 = vmul.f32 %v743, 1.442695
    %v759 = vpow.pop %v758
    %v760 = vsel %vm679, %v745, 0.0
    %v761 = vrot.slane %v760, 4
    %v762 = vadd.f32 %v760, %v761
    %v763 = vrot.slane %v762, 2
    %v764 = vadd.f32 %v762, %v763
    %v765 = vrot.slane %v764, 1
    %v766 = vadd.f32 %v764, %v765
    %v767 = vsel %vm679, %v747, 0.0
    %v768 = vrot.slane %v767, 4
    %v769 = vadd.f32 %v767, %v768
    %v770 = vrot.slane %v769, 2
    %v771 = vadd.f32 %v769, %v770
    %v772 = vrot.slane %v771, 1
    %v773 = vadd.f32 %v771, %v772
    %v774 = vsel %vm679, %v749, 0.0
    %v775 = vrot.slane %v774, 4
    %v776 = vadd.f32 %v774, %v775
    %v777 = vrot.slane %v776, 2
    %v778 = vadd.f32 %v776, %v777
    %v779 = vrot.slane %v778, 1
    %v780 = vadd.f32 %v778, %v779
    %v781 = vsel %vm679, %v751, 0.0
    %v782 = vrot.slane %v781, 4
    %v783 = vadd.f32 %v781, %v782
    %v784 = vrot.slane %v783, 2
    %v785 = vadd.f32 %v783, %v784
    %v786 = vrot.slane %v785, 1
    %v787 = vadd.f32 %v785, %v786
    %v788 = vsel %vm679, %v753, 0.0
    %v789 = vrot.slane %v788, 4
    %v790 = vadd.f32 %v788, %v789
    %v791 = vrot.slane %v790, 2
    %v792 = vadd.f32 %v790, %v791
    %v793 = vrot.slane %v792, 1
    %v794 = vadd.f32 %v792, %v793
    %v795 = vsel %vm679, %v755, 0.0
    %v796 = vrot.slane %v795, 4
    %v797 = vadd.f32 %v795, %v796
    %v798 = vrot.slane %v797, 2
    %v799 = vadd.f32 %v797, %v798
    %v800 = vrot.slane %v799, 1
    %v801 = vadd.f32 %v799, %v800
    %v802 = vsel %vm679, %v757, 0.0
    %v803 = vrot.slane %v802, 4
    %v804 = vadd.f32 %v802, %v803
    %v805 = vrot.slane %v804, 2
    %v806 = vadd.f32 %v804, %v805
    %v807 = vrot.slane %v806, 1
    %v808 = vadd.f32 %v806, %v807
    %v809 = vsel %vm679, %v759, 0.0
    %v810 = vrot.slane %v809, 4
    %v811 = vadd.f32 %v809, %v810
    %v812 = vrot.slane %v811, 2
    %v813 = vadd.f32 %v811, %v812
    %v814 = vrot.slane %v813, 1
    %v815 = vadd.f32 %v813, %v814
    %v816 = vlog2.pop %v766
    %v817 = vmul.f32 %v816, 0.6931472
    %v818 = vlog2.pop %v773
    %v819 = vmul.f32 %v818, 0.6931472
    %v820 = vlog2.pop %v780
    %v821 = vmul.f32 %v820, 0.6931472
    %v822 = vlog2.pop %v787
    %v823 = vmul.f32 %v822, 0.6931472
    %v824 = vlog2.pop %v794
    %v825 = vmul.f32 %v824, 0.6931472
    %v826 = vlog2.pop %v801
    %v827 = vmul.f32 %v826, 0.6931472
    %v828 = vlog2.pop %v808
    %v829 = vmul.f32 %v828, 0.6931472
    %v830 = vlog2.pop %v815
    %v831 = vmul.f32 %v830, 0.6931472
    %v832 = vadd.f32 %v686, %v817
    %v833 = vadd.f32 %v693, %v819
    %v834 = vadd.f32 %v700, %v821
    %v835 = vadd.f32 %v707, %v823
    %v836 = vadd.f32 %v714, %v825
    %v837 = vadd.f32 %v721, %v827
    %v838 = vadd.f32 %v728, %v829
    %v839 = vadd.f32 %v735, %v831
    %v840 = vsub.f32 %v641, %v832
    %v841 = vsub.f32 %v646, %v833
    %v842 = vsub.f32 %v651, %v834
    %v843 = vsub.f32 %v656, %v835
    %v844 = vsub.f32 %v661, %v836
    %v845 = vsub.f32 %v666, %v837
    %v846 = vsub.f32 %v671, %v838
    %v847 = vsub.f32 %v676, %v839
    %v848 = vmul.f32 %v840, %v15
    %v849 = vmul.f32 %v841, %v16
    %v850 = vmul.f32 %v842, %v17
    %v851 = vmul.f32 %v843, %v18
    %v852 = vmul.f32 %v844, %v19
    %v853 = vmul.f32 %v845, %v20
    %v854 = vmul.f32 %v846, %v21
    %v855 = vmul.f32 %v847, %v22
    %v856 = vsel %vm679, %v848, 0.0
    %v857 = vrot.slane %v856, 4
    %v858 = vadd.f32 %v856, %v857
    %v859 = vrot.slane %v858, 2
    %v860 = vadd.f32 %v858, %v859
    %v861 = vrot.slane %v860, 1
    %v862 = vadd.f32 %v860, %v861
    %v863 = vsel %vm679, %v849, 0.0
    %v864 = vrot.slane %v863, 4
    %v865 = vadd.f32 %v863, %v864
    %v866 = vrot.slane %v865, 2
    %v867 = vadd.f32 %v865, %v866
    %v868 = vrot.slane %v867, 1
    %v869 = vadd.f32 %v867, %v868
    %v870 = vsel %vm679, %v850, 0.0
    %v871 = vrot.slane %v870, 4
    %v872 = vadd.f32 %v870, %v871
    %v873 = vrot.slane %v872, 2
    %v874 = vadd.f32 %v872, %v873
    %v875 = vrot.slane %v874, 1
    %v876 = vadd.f32 %v874, %v875
    %v877 = vsel %vm679, %v851, 0.0
    %v878 = vrot.slane %v877, 4
    %v879 = vadd.f32 %v877, %v878
    %v880 = vrot.slane %v879, 2
    %v881 = vadd.f32 %v879, %v880
    %v882 = vrot.slane %v881, 1
    %v883 = vadd.f32 %v881, %v882
    %v884 = vsel %vm679, %v852, 0.0
    %v885 = vrot.slane %v884, 4
    %v886 = vadd.f32 %v884, %v885
    %v887 = vrot.slane %v886, 2
    %v888 = vadd.f32 %v886, %v887
    %v889 = vrot.slane %v888, 1
    %v890 = vadd.f32 %v888, %v889
    %v891 = vsel %vm679, %v853, 0.0
    %v892 = vrot.slane %v891, 4
    %v893 = vadd.f32 %v891, %v892
    %v894 = vrot.slane %v893, 2
    %v895 = vadd.f32 %v893, %v894
    %v896 = vrot.slane %v895, 1
    %v897 = vadd.f32 %v895, %v896
    %v898 = vsel %vm679, %v854, 0.0
    %v899 = vrot.slane %v898, 4
    %v900 = vadd.f32 %v898, %v899
    %v901 = vrot.slane %v900, 2
    %v902 = vadd.f32 %v900, %v901
    %v903 = vrot.slane %v902, 1
    %v904 = vadd.f32 %v902, %v903
    %v905 = vsel %vm679, %v855, 0.0
    %v906 = vrot.slane %v905, 4
    %v907 = vadd.f32 %v905, %v906
    %v908 = vrot.slane %v907, 2
    %v909 = vadd.f32 %v907, %v908
    %v910 = vrot.slane %v909, 1
    %v911 = vadd.f32 %v909, %v910
    %vm920 = vcmask 1041409
    %v921 = vsel %vm920, %v869, %v862
    %vm922 = vcmask 1042434
    %v923 = vsel %vm922, %v876, %v921
    %vm924 = vcmask 1043459
    %v925 = vsel %vm924, %v883, %v923
    %vm926 = vcmask 1044484
    %v927 = vsel %vm926, %v890, %v925
    %vm928 = vcmask 1045509
    %v929 = vsel %vm928, %v897, %v927
    %vm930 = vcmask 1046534
    %v931 = vsel %vm930, %v904, %v929
    %vm932 = vcmask 1047559
    %v933 = vsel %vm932, %v911, %v931
    %935 = vst.msk [vmem:[#allocation2] sm:$0xff] %vm679, %v933
    // Predicated region
    $region14: #{categorical_world_forward.1} parent=1 // pred_check
      _
    $region15: #{categorical_world_forward.1} parent=1 // pred_check_branch
      %937 = sbr.rel (0) target = $region17
    $region16: #{categorical_world_forward.1} parent=1 // pred_region
      %s939 = ssub.s32 128, 128
      %940 = vsyncadd [#allocation3], %s939
      %s942 = sshll.u32 [#allocation2], 4
      %s943 = int_to_ptr.vmem [resolvable:$true] %s942
      %945 = dma.vmem_to_hbm [thread:$0]  %s943, 128, %s3, [#allocation3]
    $region17: #{categorical_world_forward.1} parent=1 // pred_fallthru
      _
    // Predicated region
    $region18: #{categorical_world_forward.1} parent=1 // pred_check
      _
    $region19: #{categorical_world_forward.1} parent=1 // pred_check_branch
      %947 = sbr.rel (0) target = $region21
    $region20: #{categorical_world_forward.1} parent=1 // pred_region
      %948 = dma.done [#allocation3], 128
    $region21: #{categorical_world_forward.1} parent=1 // pred_fallthru
      _
    %949 = vsyncpa [#allocation3], 1

</llo_original>
